<compile_context>
chip_gen: v6e
topology: v6e:2x2x1
jax: 0.10.0
libtpu: 0.0.40
codegen_flags: <defaults>
</compile_context>

<pallas_src>
import jax
import jax.numpy as jnp
from jax import lax
from jax.experimental import pallas as pl
from jax.experimental.pallas import tpu as pltpu

LANE = 128


def _round_up(x, m):
    return ((x + m - 1) // m) * m


def _lgcn_kernel(pai_ref, adjs_ref, s_ref, theta_ref, theta_t_ref, x_ref,
                 w1_ref, b1_ref, w2_ref, b2_ref, mask_ref, out_ref):
    V, N, _ = adjs_ref.shape

    # --- softmax over the view-mixing logits pai (max-subtracted) ---
    pai = pai_ref[...]                                  # (1, V) f32
    e = jnp.exp(pai - jnp.max(pai))
    w = e / jnp.sum(e)                                  # (1, V)

    # --- weighted sum of adjacency views; start from view 0 (no zero-fill) ---
    adj = w[0:1, 0:1] * adjs_ref[0]
    for i in range(1, V):                               # V is small & static
        adj = adj + w[0:1, i:i + 1] * adjs_ref[i]

    # --- thred_proj(theta): thr[i, j] = sigmoid(theta[min(i, j)]) ---
    # Built from (N,1) / (1,N) broadcasts inside the select; no (N,N) transpose.
    ts_col = jax.nn.sigmoid(theta_ref[...])             # (N, 1)
    ts_row = jax.nn.sigmoid(theta_t_ref[...])           # (1, N) (theta pre-transposed)
    ii = lax.broadcasted_iota(jnp.int32, (N, N), 0)
    jj = lax.broadcasted_iota(jnp.int32, (N, N), 1)
    thr = jnp.where(ii <= jj, ts_col, ts_row)

    # --- learned symmetric mask, thresholded ---
    S = s_ref[...]
    s_sym = jax.nn.sigmoid((S + S.T) * 0.5)
    adj_s = adj * jnp.maximum(s_sym - thr, 0.0)

    # --- GCN layer 1: relu(adj_S @ (X @ W1) + b1) ---
    support1 = jnp.dot(x_ref[...], w1_ref[...], preferred_element_type=jnp.float32)
    z = jnp.dot(adj_s, support1, preferred_element_type=jnp.float32) + b1_ref[...]
    z = jnp.maximum(z, 0.0)

    # --- dropout (inverted); mask includes the 1/(1-p) scale ---
    z = z * mask_ref[...]

    # --- GCN layer 2: adj_S @ (Z @ W2) + b2 ---
    support2 = jnp.dot(z, w2_ref[...], preferred_element_type=jnp.float32)
    out = jnp.dot(adj_s, support2, preferred_element_type=jnp.float32) + b2_ref[...]
    out_ref[...] = out.astype(out_ref.dtype)


def lgcn_forward(dropout_key, pai, adjs, S, theta, X, W1, b1, W2, b2, *, dropout_p=0.3):
    V, N, _ = adjs.shape
    dim_in = X.shape[1]
    hidden = W1.shape[1]
    dim_out = W2.shape[1]

    hidden_p = _round_up(hidden, LANE)
    out_p = _round_up(dim_out, LANE)

    # Zero-pad narrow feature dims to a full 128-lane width. Padded columns stay
    # exactly zero through relu / dropout / matmul, so sliced results are identical.
    W1p = jnp.pad(W1, ((0, 0), (0, hidden_p - hidden)))
    b1p = jnp.pad(b1, ((0, 0), (0, hidden_p - hidden)))
    W2p = jnp.pad(W2, ((0, hidden_p - hidden), (0, out_p - dim_out)))
    b2p = jnp.pad(b2, ((0, 0), (0, out_p - dim_out)))

    # Dropout keep-mask precomputed with jax.random (TPU on-chip PRNG is not
    # available under interpret mode); inverted-dropout scale folded in.
    # TODO(synk): cannot bit-match torch's RNG stream for the dropout mask.
    if dropout_p > 0.0:
        keep = jax.random.bernoulli(dropout_key, 1.0 - dropout_p, (N, hidden_p))
        mask = keep.astype(jnp.float32) / (1.0 - dropout_p)
    else:
        mask = jnp.ones((N, hidden_p), jnp.float32)

    theta_t = theta.T                                   # (1, N), pre-transposed

    inputs = (pai, adjs, S, theta, theta_t, X, W1p, b1p, W2p, b2p, mask)

    flops = 2 * (N * dim_in * hidden_p + N * N * hidden_p
                 + N * hidden_p * out_p + N * N * out_p) + (V + 6) * N * N
    transcendentals = N * N + 2 * N + V
    bytes_accessed = sum(int(a.size) * a.dtype.itemsize for a in inputs) + N * out_p * 4
    vmem_limit = int(min(100 * 2**20, max(16 * 2**20, 4 * bytes_accessed)))

    vmem = pl.BlockSpec(memory_space=pltpu.MemorySpace.VMEM)
    out = pl.pallas_call(
        _lgcn_kernel,
        out_shape=jax.ShapeDtypeStruct((N, out_p), jnp.float32),
        in_specs=[vmem] * len(inputs),
        out_specs=vmem,
        compiler_params=pltpu.CompilerParams(vmem_limit_bytes=vmem_limit),
        cost_estimate=pl.CostEstimate(flops=flops,
                                      transcendentals=transcendentals,
                                      bytes_accessed=bytes_accessed),
    )(*inputs)
    # Lane-dense slab is written by the kernel; strip the padding outside.
    return out[:, :dim_out]


if __name__ == "__main__":
    key = jax.random.PRNGKey(0)
    V, N, dim_in, dim_out = 3, 64, 32, 8
    hidden = dim_in // 2

    k = jax.random.split(key, 8)
    adjs = jax.random.uniform(k[0], (V, N, N), jnp.float32)
    adjs = 0.5 * (adjs + jnp.transpose(adjs, (0, 2, 1)))     # symmetric adjacency views
    X = jax.random.normal(k[1], (N, dim_in), jnp.float32)
    S = jax.random.normal(k[2], (N, N), jnp.float32)          # nn.Parameter(randn_like(adjs[0]))
    theta = jnp.full((N, 1), -5.0, jnp.float32)               # FloatTensor([-5]).repeat(N, 1)
    pai = jnp.full((1, V), 1.0 / V, jnp.float32)              # ones(V) / V

    bound1 = 1.0 / jnp.sqrt(jnp.float32(hidden))              # GraphConvolution reset_parameters
    W1 = jax.random.uniform(k[3], (dim_in, hidden), jnp.float32, -bound1, bound1)
    b1 = jax.random.uniform(k[4], (1, hidden), jnp.float32, -bound1, bound1)
    bound2 = 1.0 / jnp.sqrt(jnp.float32(dim_out))
    W2 = jax.random.uniform(k[5], (hidden, dim_out), jnp.float32, -bound2, bound2)
    b2 = jax.random.uniform(k[6], (1, dim_out), jnp.float32, -bound2, bound2)
    drop_key = k[7]

    # Pure-JAX reference (dropout disabled so the comparison is deterministic).
    def ref_forward(pai, adjs, S, theta, X, W1, b1, W2, b2):
        w = jax.nn.softmax(pai[0])
        adj = jnp.tensordot(w, adjs, axes=1)
        ts = jax.nn.sigmoid(theta)
        ii = jnp.arange(N)[:, None]
        jj = jnp.arange(N)[None, :]
        thr = jnp.where(ii <= jj, ts, ts.T)
        s_sym = jax.nn.sigmoid((S + S.T) / 2)
        adj_s = adj * jnp.maximum(s_sym - thr, 0.0)
        z = jnp.maximum(adj_s @ (X @ W1) + b1, 0.0)
        return adj_s @ (z @ W2) + b2

    out_nodrop = lgcn_forward(drop_key, pai, adjs, S, theta, X, W1, b1, W2, b2, dropout_p=0.0)
    ref = ref_forward(pai, adjs, S, theta, X, W1, b1, W2, b2)
    assert jnp.allclose(out_nodrop, ref, atol=1e-4, rtol=1e-4), "kernel mismatch vs JAX reference"

    out = lgcn_forward(drop_key, pai, adjs, S, theta, X, W1, b1, W2, b2, dropout_p=0.3)
    out = jax.block_until_ready(out)
    assert out.shape == (N, dim_out)
    assert bool(jnp.all(jnp.isfinite(out)))
    print("KERNEL_OK")
</pallas_src>

<mosaic_0001>
module attributes {stable_mosaic.version = 11 : i64} {
  func.func @_lgcn_kernel(%arg0: memref<1x3xf32, #tpu.memory_space<vmem>>, %arg1: memref<3x64x64xf32, #tpu.memory_space<vmem>>, %arg2: memref<64x64xf32, #tpu.memory_space<vmem>>, %arg3: memref<64x1xf32, #tpu.memory_space<vmem>>, %arg4: memref<1x64xf32, #tpu.memory_space<vmem>>, %arg5: memref<64x32xf32, #tpu.memory_space<vmem>>, %arg6: memref<32x128xf32, #tpu.memory_space<vmem>>, %arg7: memref<1x128xf32, #tpu.memory_space<vmem>>, %arg8: memref<128x128xf32, #tpu.memory_space<vmem>>, %arg9: memref<1x128xf32, #tpu.memory_space<vmem>>, %arg10: memref<64x128xf32, #tpu.memory_space<vmem>>, %arg11: memref<64x128xf32, #tpu.memory_space<vmem>>) attributes {dimension_semantics = [], scalar_prefetch = 0 : i64, scratch_operands = 0 : i64, tpu.core_type = #tpu.core_type<tc>} {
    %c0 = arith.constant 0 : index
    %c0_0 = arith.constant 0 : index
    %0 = vector.load %arg0[%c0, %c0_0] : memref<1x3xf32, #tpu.memory_space<vmem>>, vector<1x3xf32>
    %1 = vector.shape_cast %0 : vector<1x3xf32> to vector<1x1x3xf32>
    %cst = arith.constant dense<0xFF800000> : vector<1xf32>
    %2 = vector.multi_reduction <maximumf>, %1, %cst [1, 2] : vector<1x1x3xf32> to vector<1xf32>
    %3 = vector.shape_cast %2 : vector<1xf32> to vector<1x1x1xf32>
    %4 = vector.extract %3[0, 0, 0] : f32 from vector<1x1x1xf32>
    %5 = vector.broadcast %4 : f32 to vector<1x3xf32>
    %6 = arith.subf %0, %5 : vector<1x3xf32>
    %7 = math.exp %6 : vector<1x3xf32>
    %8 = vector.shape_cast %7 : vector<1x3xf32> to vector<1x1x3xf32>
    %cst_1 = arith.constant dense<0.000000e+00> : vector<1xf32>
    %9 = vector.multi_reduction <add>, %8, %cst_1 [1, 2] : vector<1x1x3xf32> to vector<1xf32>
    %10 = vector.shape_cast %9 : vector<1xf32> to vector<1x1x1xf32>
    %11 = vector.extract %10[0, 0, 0] : f32 from vector<1x1x1xf32>
    %12 = vector.broadcast %11 : f32 to vector<1x3xf32>
    %13 = arith.divf %7, %12 : vector<1x3xf32>
    %14 = vector.extract_strided_slice %13 {offsets = [0, 0], sizes = [1, 1], strides = [1, 1]} : vector<1x3xf32> to vector<1x1xf32>
    %c0_2 = arith.constant 0 : index
    %c0_3 = arith.constant 0 : index
    %c0_4 = arith.constant 0 : index
    %15 = vector.load %arg1[%c0_2, %c0_3, %c0_4] : memref<3x64x64xf32, #tpu.memory_space<vmem>>, vector<1x64x64xf32>
    %16 = vector.shape_cast %15 : vector<1x64x64xf32> to vector<64x64xf32>
    %17 = vector.broadcast %14 : vector<1x1xf32> to vector<64x64xf32>
    %18 = arith.mulf %17, %16 : vector<64x64xf32>
    %19 = vector.extract_strided_slice %13 {offsets = [0, 1], sizes = [1, 1], strides = [1, 1]} : vector<1x3xf32> to vector<1x1xf32>
    %c1 = arith.constant 1 : index
    %c0_5 = arith.constant 0 : index
    %c0_6 = arith.constant 0 : index
    %20 = vector.load %arg1[%c1, %c0_5, %c0_6] : memref<3x64x64xf32, #tpu.memory_space<vmem>>, vector<1x64x64xf32>
    %21 = vector.shape_cast %20 : vector<1x64x64xf32> to vector<64x64xf32>
    %22 = vector.broadcast %19 : vector<1x1xf32> to vector<64x64xf32>
    %23 = arith.mulf %22, %21 : vector<64x64xf32>
    %24 = arith.addf %18, %23 : vector<64x64xf32>
    %25 = vector.extract_strided_slice %13 {offsets = [0, 2], sizes = [1, 1], strides = [1, 1]} : vector<1x3xf32> to vector<1x1xf32>
    %c2 = arith.constant 2 : index
    %c0_7 = arith.constant 0 : index
    %c0_8 = arith.constant 0 : index
    %26 = vector.load %arg1[%c2, %c0_7, %c0_8] : memref<3x64x64xf32, #tpu.memory_space<vmem>>, vector<1x64x64xf32>
    %27 = vector.shape_cast %26 : vector<1x64x64xf32> to vector<64x64xf32>
    %28 = vector.broadcast %25 : vector<1x1xf32> to vector<64x64xf32>
    %29 = arith.mulf %28, %27 : vector<64x64xf32>
    %30 = arith.addf %24, %29 : vector<64x64xf32>
    %c0_9 = arith.constant 0 : index
    %c0_10 = arith.constant 0 : index
    %31 = vector.load %arg3[%c0_9, %c0_10] : memref<64x1xf32, #tpu.memory_space<vmem>>, vector<64x1xf32>
    %32 = arith.negf %31 : vector<64x1xf32>
    %33 = math.exp %32 : vector<64x1xf32>
    %cst_11 = arith.constant 1.000000e+00 : f32
    %34 = vector.broadcast %cst_11 : f32 to vector<64x1xf32>
    %35 = arith.addf %34, %33 : vector<64x1xf32>
    %36 = arith.divf %34, %35 : vector<64x1xf32>
    %c0_12 = arith.constant 0 : index
    %c0_13 = arith.constant 0 : index
    %37 = vector.load %arg4[%c0_12, %c0_13] : memref<1x64xf32, #tpu.memory_space<vmem>>, vector<1x64xf32>
    %38 = arith.negf %37 : vector<1x64xf32>
    %39 = math.exp %38 : vector<1x64xf32>
    %cst_14 = arith.constant 1.000000e+00 : f32
    %40 = vector.broadcast %cst_14 : f32 to vector<1x64xf32>
    %41 = arith.addf %40, %39 : vector<1x64xf32>
    %42 = arith.divf %40, %41 : vector<1x64xf32>
    %43 = tpu.iota {dimensions = array<i32: 0>} : vector<64x64xi32>
    %44 = tpu.iota {dimensions = array<i32: 1>} : vector<64x64xi32>
    %45 = arith.cmpi sle, %43, %44 : vector<64x64xi32>
    %46 = vector.shape_cast %36 : vector<64x1xf32> to vector<64x1xf32>
    %47 = vector.broadcast %46 : vector<64x1xf32> to vector<64x64xf32>
    %48 = vector.shape_cast %42 : vector<1x64xf32> to vector<1x64xf32>
    %49 = vector.broadcast %48 : vector<1x64xf32> to vector<64x64xf32>
    %50 = arith.select %45, %47, %49 : vector<64x64xi1>, vector<64x64xf32>
    %c0_15 = arith.constant 0 : index
    %c0_16 = arith.constant 0 : index
    %51 = vector.load %arg2[%c0_15, %c0_16] : memref<64x64xf32, #tpu.memory_space<vmem>>, vector<64x64xf32>
    %52 = tpu.transpose %51, [1, 0] : vector<64x64xf32> -> vector<64x64xf32>
    %53 = arith.addf %51, %52 : vector<64x64xf32>
    %cst_17 = arith.constant 5.000000e-01 : f32
    %54 = vector.broadcast %cst_17 : f32 to vector<64x64xf32>
    %55 = arith.mulf %53, %54 : vector<64x64xf32>
    %56 = arith.negf %55 : vector<64x64xf32>
    %57 = math.exp %56 : vector<64x64xf32>
    %cst_18 = arith.constant 1.000000e+00 : f32
    %58 = vector.broadcast %cst_18 : f32 to vector<64x64xf32>
    %59 = arith.addf %58, %57 : vector<64x64xf32>
    %60 = arith.divf %58, %59 : vector<64x64xf32>
    %61 = arith.subf %60, %50 : vector<64x64xf32>
    %cst_19 = arith.constant 0.000000e+00 : f32
    %62 = vector.broadcast %cst_19 : f32 to vector<64x64xf32>
    %63 = arith.maximumf %61, %62 : vector<64x64xf32>
    %64 = arith.mulf %30, %63 : vector<64x64xf32>
    %c0_20 = arith.constant 0 : index
    %c0_21 = arith.constant 0 : index
    %65 = vector.load %arg5[%c0_20, %c0_21] : memref<64x32xf32, #tpu.memory_space<vmem>>, vector<64x32xf32>
    %c0_22 = arith.constant 0 : index
    %c0_23 = arith.constant 0 : index
    %66 = vector.load %arg6[%c0_22, %c0_23] : memref<32x128xf32, #tpu.memory_space<vmem>>, vector<32x128xf32>
    %cst_24 = arith.constant dense<0.000000e+00> : vector<64x128xf32>
    %67 = tpu.matmul %65, %66, %cst_24 {dimension_numbers = #tpu.dot_dimension_numbers<[1], [0], [0], [1], [0, 0, 1, 1], [], []>} : vector<64x32xf32>, vector<32x128xf32>, vector<64x128xf32> -> vector<64x128xf32>
    %cst_25 = arith.constant dense<0.000000e+00> : vector<64x128xf32>
    %68 = tpu.matmul %64, %67, %cst_25 {dimension_numbers = #tpu.dot_dimension_numbers<[1], [0], [0], [1], [0, 0, 1, 1], [], []>} : vector<64x64xf32>, vector<64x128xf32>, vector<64x128xf32> -> vector<64x128xf32>
    %c0_26 = arith.constant 0 : index
    %c0_27 = arith.constant 0 : index
    %69 = vector.load %arg7[%c0_26, %c0_27] : memref<1x128xf32, #tpu.memory_space<vmem>>, vector<1x128xf32>
    %70 = vector.broadcast %69 : vector<1x128xf32> to vector<64x128xf32>
    %71 = arith.addf %68, %70 : vector<64x128xf32>
    %cst_28 = arith.constant 0.000000e+00 : f32
    %72 = vector.broadcast %cst_28 : f32 to vector<64x128xf32>
    %73 = arith.maximumf %71, %72 : vector<64x128xf32>
    %c0_29 = arith.constant 0 : index
    %c0_30 = arith.constant 0 : index
    %74 = vector.load %arg10[%c0_29, %c0_30] : memref<64x128xf32, #tpu.memory_space<vmem>>, vector<64x128xf32>
    %75 = arith.mulf %73, %74 : vector<64x128xf32>
    %c0_31 = arith.constant 0 : index
    %c0_32 = arith.constant 0 : index
    %76 = vector.load %arg8[%c0_31, %c0_32] : memref<128x128xf32, #tpu.memory_space<vmem>>, vector<128x128xf32>
    %cst_33 = arith.constant dense<0.000000e+00> : vector<64x128xf32>
    %77 = tpu.matmul %75, %76, %cst_33 {dimension_numbers = #tpu.dot_dimension_numbers<[1], [0], [0], [1], [0, 0, 1, 1], [], []>} : vector<64x128xf32>, vector<128x128xf32>, vector<64x128xf32> -> vector<64x128xf32>
    %cst_34 = arith.constant dense<0.000000e+00> : vector<64x128xf32>
    %78 = tpu.matmul %64, %77, %cst_34 {dimension_numbers = #tpu.dot_dimension_numbers<[1], [0], [0], [1], [0, 0, 1, 1], [], []>} : vector<64x64xf32>, vector<64x128xf32>, vector<64x128xf32> -> vector<64x128xf32>
    %c0_35 = arith.constant 0 : index
    %c0_36 = arith.constant 0 : index
    %79 = vector.load %arg9[%c0_35, %c0_36] : memref<1x128xf32, #tpu.memory_space<vmem>>, vector<1x128xf32>
    %80 = vector.broadcast %79 : vector<1x128xf32> to vector<64x128xf32>
    %81 = arith.addf %78, %80 : vector<64x128xf32>
    %c0_37 = arith.constant 0 : index
    %c0_38 = arith.constant 0 : index
    %82 = vector.load %arg11[%c0_37, %c0_38] : memref<64x128xf32, #tpu.memory_space<vmem>>, vector<64x128xf32>
    tpu.vector_store %arg11[%c0_37, %c0_38], %81 {strides = array<i32>} : memref<64x128xf32, #tpu.memory_space<vmem>>, vector<64x128xf32>,
    return
  }
}

</mosaic_0001>

<llo_original>
// kernel: tpu_custom_call.1
$region0: #{tpu_custom_call.1}
  #allocation0 [shape = 'u32[]', space=smem, size = 0x4, offset = 0x4, fixed_abs, tag = 'smem constant byte address 0x4 - core index']
  #allocation1 [shape = 'u32[144,128]{1,0:T(1,128)}', space=vmem, size = 0x12000, scoped, tag = 'internal scratch']
  %s0 = inlined_call_operand.vmem [shape: f32[1,3], index: 0, kind: input, shape index: {}]
  %s1 = inlined_call_operand.hbm [shape: f32[3,64,64], index: 1, kind: input, shape index: {}]
  %s2 = inlined_call_operand.hbm [shape: f32[64,64], index: 2, kind: input, shape index: {}]
  %s3 = inlined_call_operand.vmem [shape: f32[64,1], index: 3, kind: input, shape index: {}]
  %s4 = inlined_call_operand.vmem [shape: f32[1,64], index: 4, kind: input, shape index: {}]
  %s5 = inlined_call_operand.vmem [shape: f32[64,32], index: 5, kind: input, shape index: {}]
  %s6 = inlined_call_operand.vmem [shape: f32[32,128], index: 6, kind: input, shape index: {}]
  %s7 = inlined_call_operand.vmem [shape: f32[1,128], index: 7, kind: input, shape index: {}]
  %s8 = inlined_call_operand.vmem [shape: f32[128,128], index: 8, kind: input, shape index: {}]
  %s9 = inlined_call_operand.vmem [shape: f32[1,128], index: 9, kind: input, shape index: {}]
  %s10 = inlined_call_operand.hbm [shape: f32[64,128], index: 10, kind: input, shape index: {}]
  %s11 = inlined_call_operand.hbm [shape: f32[64,128], index: 11, kind: output, shape index: {}]
  %s12 = sld [smem:[#allocation0]]
  $region66: #{tpu_custom_call.1} parent=0
    _
  %s14 = ssub.s32 1, %s12
  %s15 = scalar_select 0, %s14, %s12
  $region1: #{tpu_custom_call.1} parent=0
    #allocation2 [shape = 'u8[98304]{0}', space=vmem, size = 0x18000, scoped, tag = 'input window, operand 1, single buffered']
    #allocation3 [shape = 's32[1]{0}', space=sflag, size = 0x4, scoped, tag = 'scoped memory for tpu_custom_call.1']
    #allocation4 [shape = 's32[1]{0}', space=sflag, size = 0x4, scoped, tag = 'scoped memory for tpu_custom_call.1']
    #allocation5 [shape = 'u8[32768]{0}', space=vmem, size = 0x8000, scoped, tag = 'input window, operand 2, single buffered']
    #allocation6 [shape = 's32[1]{0}', space=sflag, size = 0x4, scoped, tag = 'scoped memory for tpu_custom_call.1']
    #allocation7 [shape = 'u8[32768]{0}', space=vmem, size = 0x8000, scoped, tag = 'input window, operand 10, single buffered']
    #allocation8 [shape = 'u8[32768]{0}', space=vmem, size = 0x8000, scoped, tag = 'output window, operand 0, single buffered']
    %16 = vsyncpa [#allocation3], 0
    %17 = vsyncpa [#allocation6], 0
    %18 = vsyncpa [#allocation4], 0
    // Predicated region
    $region2: #{tpu_custom_call.1} parent=1 // pred_check
      _
    $region3: #{tpu_custom_call.1} parent=1 // pred_check_branch
      %20 = sbr.rel (0) target = $region5
    $region4: #{tpu_custom_call.1} parent=1 // pred_region
      _
    $region5: #{tpu_custom_call.1} parent=1 // pred_fallthru
      _
    // Predicated region
    $region6: #{tpu_custom_call.1} parent=1 // pred_check
      _
    $region7: #{tpu_custom_call.1} parent=1 // pred_check_branch
      %22 = sbr.rel (0) target = $region9
    $region8: #{tpu_custom_call.1} parent=1 // pred_region
      %s24 = ssub.s32 3072, 3072
      %25 = vsyncadd [#allocation3], %s24
      %s26 = sshll.u32 [#allocation2], 4
      %s27 = int_to_ptr.vmem [resolvable:$true] %s26
      %32 = dma.hbm_to_vmem [thread:$0]  %s1, 3072, %s27, [#allocation3], 128, 128, 8
    $region9: #{tpu_custom_call.1} parent=1 // pred_fallthru
      _
    // Predicated region
    $region10: #{tpu_custom_call.1} parent=1 // pred_check
      _
    $region11: #{tpu_custom_call.1} parent=1 // pred_check_branch
      %34 = sbr.rel (0) target = $region13
    $region12: #{tpu_custom_call.1} parent=1 // pred_region
      %s36 = ssub.s32 1024, 1024
      %37 = vsyncadd [#allocation6], %s36
      %s38 = sshll.u32 [#allocation5], 4
      %s39 = int_to_ptr.vmem [resolvable:$true] %s38
      %44 = dma.hbm_to_vmem [thread:$0]  %s2, 1024, %s39, [#allocation6], 128, 128, 8
    $region13: #{tpu_custom_call.1} parent=1 // pred_fallthru
      _
    // Predicated region
    $region14: #{tpu_custom_call.1} parent=1 // pred_check
      _
    $region15: #{tpu_custom_call.1} parent=1 // pred_check_branch
      %46 = sbr.rel (0) target = $region17
    $region16: #{tpu_custom_call.1} parent=1 // pred_region
      _
    $region17: #{tpu_custom_call.1} parent=1 // pred_fallthru
      _
    // Predicated region
    $region18: #{tpu_custom_call.1} parent=1 // pred_check
      _
    $region19: #{tpu_custom_call.1} parent=1 // pred_check_branch
      %48 = sbr.rel (0) target = $region21
    $region20: #{tpu_custom_call.1} parent=1 // pred_region
      _
    $region21: #{tpu_custom_call.1} parent=1 // pred_fallthru
      _
    // Predicated region
    $region22: #{tpu_custom_call.1} parent=1 // pred_check
      _
    $region23: #{tpu_custom_call.1} parent=1 // pred_check_branch
      %50 = sbr.rel (0) target = $region25
    $region24: #{tpu_custom_call.1} parent=1 // pred_region
      _
    $region25: #{tpu_custom_call.1} parent=1 // pred_fallthru
      _
    // Predicated region
    $region26: #{tpu_custom_call.1} parent=1 // pred_check
      _
    $region27: #{tpu_custom_call.1} parent=1 // pred_check_branch
      %52 = sbr.rel (0) target = $region29
    $region28: #{tpu_custom_call.1} parent=1 // pred_region
      _
    $region29: #{tpu_custom_call.1} parent=1 // pred_fallthru
      _
    // Predicated region
    $region30: #{tpu_custom_call.1} parent=1 // pred_check
      _
    $region31: #{tpu_custom_call.1} parent=1 // pred_check_branch
      %54 = sbr.rel (0) target = $region33
    $region32: #{tpu_custom_call.1} parent=1 // pred_region
      _
    $region33: #{tpu_custom_call.1} parent=1 // pred_fallthru
      _
    // Predicated region
    $region34: #{tpu_custom_call.1} parent=1 // pred_check
      _
    $region35: #{tpu_custom_call.1} parent=1 // pred_check_branch
      %56 = sbr.rel (0) target = $region37
    $region36: #{tpu_custom_call.1} parent=1 // pred_region
      _
    $region37: #{tpu_custom_call.1} parent=1 // pred_fallthru
      _
    // Predicated region
    $region38: #{tpu_custom_call.1} parent=1 // pred_check
      _
    $region39: #{tpu_custom_call.1} parent=1 // pred_check_branch
      %58 = sbr.rel (0) target = $region41
    $region40: #{tpu_custom_call.1} parent=1 // pred_region
      _
    $region41: #{tpu_custom_call.1} parent=1 // pred_fallthru
      _
    // Predicated region
    $region42: #{tpu_custom_call.1} parent=1 // pred_check
      _
    $region43: #{tpu_custom_call.1} parent=1 // pred_check_branch
      %60 = sbr.rel (0) target = $region45
    $region44: #{tpu_custom_call.1} parent=1 // pred_region
      %s62 = ssub.s32 1024, 1024
      %63 = vsyncadd [#allocation6], %s62
      %s64 = sshll.u32 [#allocation7], 4
      %s65 = int_to_ptr.vmem [resolvable:$true] %s64
      %70 = dma.hbm_to_vmem [thread:$0]  %s10, 1024, %s65, [#allocation6], 128, 128, 8
    $region45: #{tpu_custom_call.1} parent=1 // pred_fallthru
      _
    // Predicated region
    $region46: #{tpu_custom_call.1} parent=1 // pred_check
      _
    $region47: #{tpu_custom_call.1} parent=1 // pred_check_branch
      %72 = sbr.rel (0) target = $region49
    $region48: #{tpu_custom_call.1} parent=1 // pred_region
      %73 = dma.done [#allocation3], 3072
    $region49: #{tpu_custom_call.1} parent=1 // pred_fallthru
      _
    // Predicated region
    $region50: #{tpu_custom_call.1} parent=1 // pred_check
      _
    $region51: #{tpu_custom_call.1} parent=1 // pred_check_branch
      %75 = sbr.rel (0) target = $region53
    $region52: #{tpu_custom_call.1} parent=1 // pred_region
      %76 = dma.done [#allocation6], 1024
    $region53: #{tpu_custom_call.1} parent=1 // pred_fallthru
      _
    // Predicated region
    $region54: #{tpu_custom_call.1} parent=1 // pred_check
      _
    $region55: #{tpu_custom_call.1} parent=1 // pred_check_branch
      %78 = sbr.rel (0) target = $region57
    $region56: #{tpu_custom_call.1} parent=1 // pred_region
      %79 = dma.done [#allocation6], 1024
    $region57: #{tpu_custom_call.1} parent=1 // pred_fallthru
      _
    %v80 = vld [vmem:[%s0] sm:$0x1]
    %vm81 = vcmask 16384
    %v82 = vsel %vm81, %v80, -inf
    %83 = vmax.xlane.f32.xlu0 %v82
    %v84 = vpop.xlane.xlu0 %83
    %v85 = vrot.slane %v84, 4
    %v86 = vmax.f32 %v84, %v85
    %v87 = vrot.slane %v86, 2
    %v88 = vmax.f32 %v86, %v87
    %v89 = vrot.slane %v88, 1
    %v90 = vmax.f32 %v88, %v89
    %s91 = vtos %v90
    %v92 = vstv %s91
    %v93 = vsub.f32 %v80, %v92
    %v94 = vmul.f32 %v93, 1.442695
    %v95 = vpow.pop %v94
    %v96 = vsel %vm81, %v95, 0.0
    %97 = vadd.xlane.f32.xlu0 %v96
    %v98 = vpop.xlane.xlu0 %97
    %v99 = vrot.slane %v98, 4
    %v100 = vadd.f32 %v98, %v99
    %v101 = vrot.slane %v100, 2
    %v102 = vadd.f32 %v100, %v101
    %v103 = vrot.slane %v102, 1
    %v104 = vadd.f32 %v102, %v103
    %s105 = vtos %v104
    %v106 = vstv %s105
    %v107 = vrcp.pop %v106
    %v108 = vmul.f32 %v95, %v107
    %v109 = vld [vmem:[#allocation2] sm:$0xff]
    %v110 = vld [vmem:[#allocation2 + $0x8] sm:$0xff]
    %v111 = vld [vmem:[#allocation2 + $0x10] sm:$0xff]
    %v112 = vld [vmem:[#allocation2 + $0x18] sm:$0xff]
    %v113 = vld [vmem:[#allocation2 + $0x20] sm:$0xff]
    %v114 = vld [vmem:[#allocation2 + $0x28] sm:$0xff]
    %v115 = vld [vmem:[#allocation2 + $0x30] sm:$0xff]
    %v116 = vld [vmem:[#allocation2 + $0x38] sm:$0xff]
    %v118 = vlaneseq
    %v119 = vshrl.u32 %v118, 7
    %v120 = vsub.s32 0, %v119
    %v121 = vrot.slane %v108, %v120
    %122 = vset.pattern.permute.xlu0 0
    %123 = vperm.xlu0 %122, %v121
    %v124 = vpop.permute.xlu0 %123
    %v126 = vmul.f32 %v124, %v109
    %v127 = vmul.f32 %v124, %v110
    %v128 = vmul.f32 %v124, %v111
    %v129 = vmul.f32 %v124, %v112
    %v130 = vmul.f32 %v124, %v113
    %v131 = vmul.f32 %v124, %v114
    %v132 = vmul.f32 %v124, %v115
    %v133 = vmul.f32 %v124, %v116
    %s134 = scalar_lea.vmem [#allocation2], 64
    %v135 = vld [vmem:[%s134] sm:$0xff]
    %v136 = vld [vmem:[%s134 + $0x8] sm:$0xff]
    %v137 = vld [vmem:[%s134 + $0x10] sm:$0xff]
    %v138 = vld [vmem:[%s134 + $0x18] sm:$0xff]
    %v139 = vld [vmem:[%s134 + $0x20] sm:$0xff]
    %v140 = vld [vmem:[%s134 + $0x28] sm:$0xff]
    %v141 = vld [vmem:[%s134 + $0x30] sm:$0xff]
    %v142 = vld [vmem:[%s134 + $0x38] sm:$0xff]
    %143 = vset.pattern.permute.xlu0 1
    %144 = vperm.xlu0 %143, %v121
    %v145 = vpop.permute.xlu0 %144
    %v147 = vmul.f32 %v145, %v135
    %v148 = vmul.f32 %v145, %v136
    %v149 = vmul.f32 %v145, %v137
    %v150 = vmul.f32 %v145, %v138
    %v151 = vmul.f32 %v145, %v139
    %v152 = vmul.f32 %v145, %v140
    %v153 = vmul.f32 %v145, %v141
    %v154 = vmul.f32 %v145, %v142
    %v155 = vadd.f32 %v126, %v147
    %v156 = vadd.f32 %v127, %v148
    %v157 = vadd.f32 %v128, %v149
    %v158 = vadd.f32 %v129, %v150
    %v159 = vadd.f32 %v130, %v151
    %v160 = vadd.f32 %v131, %v152
    %v161 = vadd.f32 %v132, %v153
    %v162 = vadd.f32 %v133, %v154
    %s163 = scalar_lea.vmem [#allocation2], 128
    %v164 = vld [vmem:[%s163] sm:$0xff]
    %v165 = vld [vmem:[%s163 + $0x8] sm:$0xff]
    %v166 = vld [vmem:[%s163 + $0x10] sm:$0xff]
    %v167 = vld [vmem:[%s163 + $0x18] sm:$0xff]
    %v168 = vld [vmem:[%s163 + $0x20] sm:$0xff]
    %v169 = vld [vmem:[%s163 + $0x28] sm:$0xff]
    %v170 = vld [vmem:[%s163 + $0x30] sm:$0xff]
    %v171 = vld [vmem:[%s163 + $0x38] sm:$0xff]
    %172 = vset.pattern.permute.xlu0 2
    %173 = vperm.xlu0 %172, %v121
    %v174 = vpop.permute.xlu0 %173
    %v176 = vmul.f32 %v174, %v164
    %v177 = vmul.f32 %v174, %v165
    %v178 = vmul.f32 %v174, %v166
    %v179 = vmul.f32 %v174, %v167
    %v180 = vmul.f32 %v174, %v168
    %v181 = vmul.f32 %v174, %v169
    %v182 = vmul.f32 %v174, %v170
    %v183 = vmul.f32 %v174, %v171
    %v184 = vadd.f32 %v155, %v176
    %v185 = vadd.f32 %v156, %v177
    %v186 = vadd.f32 %v157, %v178
    %v187 = vadd.f32 %v158, %v179
    %v188 = vadd.f32 %v159, %v180
    %v189 = vadd.f32 %v160, %v181
    %v190 = vadd.f32 %v161, %v182
    %v191 = vadd.f32 %v162, %v183
    %v192 = vld [vmem:[%s3] sm:$0xff]
    %v193 = vld [vmem:[%s3 + $0x8] sm:$0xff]
    %v194 = vld [vmem:[%s3 + $0x10] sm:$0xff]
    %v195 = vld [vmem:[%s3 + $0x18] sm:$0xff]
    %v196 = vld [vmem:[%s3 + $0x20] sm:$0xff]
    %v197 = vld [vmem:[%s3 + $0x28] sm:$0xff]
    %v198 = vld [vmem:[%s3 + $0x30] sm:$0xff]
    %v199 = vld [vmem:[%s3 + $0x38] sm:$0xff]
    %v200 = vxor.u32 %v192, 2147483648
    %v201 = vxor.u32 %v193, 2147483648
    %v202 = vxor.u32 %v194, 2147483648
    %v203 = vxor.u32 %v195, 2147483648
    %v204 = vxor.u32 %v196, 2147483648
    %v205 = vxor.u32 %v197, 2147483648
    %v206 = vxor.u32 %v198, 2147483648
    %v207 = vxor.u32 %v199, 2147483648
    %v208 = vmul.f32 %v200, 1.442695
    %v209 = vpow.pop %v208
    %v210 = vmul.f32 %v201, 1.442695
    %v211 = vpow.pop %v210
    %v212 = vmul.f32 %v202, 1.442695
    %v213 = vpow.pop %v212
    %v214 = vmul.f32 %v203, 1.442695
    %v215 = vpow.pop %v214
    %v216 = vmul.f32 %v204, 1.442695
    %v217 = vpow.pop %v216
    %v218 = vmul.f32 %v205, 1.442695
    %v219 = vpow.pop %v218
    %v220 = vmul.f32 %v206, 1.442695
    %v221 = vpow.pop %v220
    %v222 = vmul.f32 %v207, 1.442695
    %v223 = vpow.pop %v222
    %v224 = vadd.f32 %v209, 1.0
    %v225 = vadd.f32 %v211, 1.0
    %v226 = vadd.f32 %v213, 1.0
    %v227 = vadd.f32 %v215, 1.0
    %v228 = vadd.f32 %v217, 1.0
    %v229 = vadd.f32 %v219, 1.0
    %v230 = vadd.f32 %v221, 1.0
    %v231 = vadd.f32 %v223, 1.0
    %v232 = vrcp.pop %v224
    %v233 = vmul.f32 1.0, %v232
    %v234 = vrcp.pop %v225
    %v235 = vmul.f32 1.0, %v234
    %v236 = vrcp.pop %v226
    %v237 = vmul.f32 1.0, %v236
    %v238 = vrcp.pop %v227
    %v239 = vmul.f32 1.0, %v238
    %v240 = vrcp.pop %v228
    %v241 = vmul.f32 1.0, %v240
    %v242 = vrcp.pop %v229
    %v243 = vmul.f32 1.0, %v242
    %v244 = vrcp.pop %v230
    %v245 = vmul.f32 1.0, %v244
    %v246 = vrcp.pop %v231
    %v247 = vmul.f32 1.0, %v246
    %v248 = vld [vmem:[%s4] sm:$0x1]
    %v249 = vxor.u32 %v248, 2147483648
    %v250 = vmul.f32 %v249, 1.442695
    %v251 = vpow.pop %v250
    %v252 = vadd.f32 %v251, 1.0
    %v253 = vrcp.pop %v252
    %v254 = vmul.f32 1.0, %v253
    %v255 = vlaneseq
    %v256 = vshrl.u32 %v255, 7
    %v257 = vadd.s32 %v256, 8
    %v258 = vadd.s32 %v256, 16
    %v259 = vadd.s32 %v256, 24
    %v260 = vadd.s32 %v256, 32
    %v261 = vadd.s32 %v256, 40
    %v262 = vadd.s32 %v256, 48
    %v263 = vadd.s32 %v256, 56
    %v264 = vlaneseq
    %v265 = vand.u32 %v264, 127
    %vm266 = vcmp.le.s32.totalorder %v256, %v265
    %vm267 = vcmp.le.s32.totalorder %v257, %v265
    %vm268 = vcmp.le.s32.totalorder %v258, %v265
    %vm269 = vcmp.le.s32.totalorder %v259, %v265
    %vm270 = vcmp.le.s32.totalorder %v260, %v265
    %vm271 = vcmp.le.s32.totalorder %v261, %v265
    %vm272 = vcmp.le.s32.totalorder %v262, %v265
    %vm273 = vcmp.le.s32.totalorder %v263, %v265
    %275 = vset.pattern.permute.xlu0 0
    %276 = vperm.xlu0 %275, %v233
    %v277 = vpop.permute.xlu0 %276
    %280 = vset.pattern.permute.xlu0 0
    %281 = vperm.xlu0 %280, %v235
    %v282 = vpop.permute.xlu0 %281
    %285 = vset.pattern.permute.xlu0 0
    %286 = vperm.xlu0 %285, %v237
    %v287 = vpop.permute.xlu0 %286
    %290 = vset.pattern.permute.xlu0 0
    %291 = vperm.xlu0 %290, %v239
    %v292 = vpop.permute.xlu0 %291
    %295 = vset.pattern.permute.xlu0 0
    %296 = vperm.xlu0 %295, %v241
    %v297 = vpop.permute.xlu0 %296
    %300 = vset.pattern.permute.xlu0 0
    %301 = vperm.xlu0 %300, %v243
    %v302 = vpop.permute.xlu0 %301
    %305 = vset.pattern.permute.xlu0 0
    %306 = vperm.xlu0 %305, %v245
    %v307 = vpop.permute.xlu0 %306
    %310 = vset.pattern.permute.xlu0 0
    %311 = vperm.xlu0 %310, %v247
    %v312 = vpop.permute.xlu0 %311
    %v315 = vlaneseq
    %v316 = vshrl.u32 %v315, 7
    %v317 = vsub.s32 0, %v316
    %v318 = vrot.slane %v254, %v317
    %v320 = vsel %vm266, %v277, %v318
    %v321 = vsel %vm267, %v282, %v318
    %v322 = vsel %vm268, %v287, %v318
    %v323 = vsel %vm269, %v292, %v318
    %v324 = vsel %vm270, %v297, %v318
    %v325 = vsel %vm271, %v302, %v318
    %v326 = vsel %vm272, %v307, %v318
    %v327 = vsel %vm273, %v312, %v318
    %v328 = vld [vmem:[#allocation5] sm:$0xff]
    %v329 = vld [vmem:[#allocation5 + $0x8] sm:$0xff]
    %v330 = vld [vmem:[#allocation5 + $0x10] sm:$0xff]
    %v331 = vld [vmem:[#allocation5 + $0x18] sm:$0xff]
    %v332 = vld [vmem:[#allocation5 + $0x20] sm:$0xff]
    %v333 = vld [vmem:[#allocation5 + $0x28] sm:$0xff]
    %v334 = vld [vmem:[#allocation5 + $0x30] sm:$0xff]
    %v335 = vld [vmem:[#allocation5 + $0x38] sm:$0xff]
    %336 = vxpose.xlu0.b32.start [1/16] %v328, 128
    %337 = vxpose.xlu0.b32.cont [2/16] %v329, 128
    %338 = vxpose.xlu0.b32.cont [3/16] %v330, 128
    %339 = vxpose.xlu0.b32.cont [4/16] %v331, 128
    %340 = vxpose.xlu0.b32.cont [5/16] %v332, 128
    %341 = vxpose.xlu0.b32.cont [6/16] %v333, 128
    %342 = vxpose.xlu0.b32.cont [7/16] %v334, 128
    %343 = vxpose.xlu0.b32.cont [8/16] %v335, 128
    %344 = vxpose.xlu0.b32.cont [9/16] 0.0, 128
    %345 = vxpose.xlu0.b32.cont [10/16] 0.0, 128
    %346 = vxpose.xlu0.b32.cont [11/16] 0.0, 128
    %347 = vxpose.xlu0.b32.cont [12/16] 0.0, 128
    %348 = vxpose.xlu0.b32.cont [13/16] 0.0, 128
    %349 = vxpose.xlu0.b32.cont [14/16] 0.0, 128
    %350 = vxpose.xlu0.b32.cont [15/16] 0.0, 128
    %351 = vxpose.xlu0.b32.end [16/16] 0.0, 128
    %v352 = vpop.trf.xlu0
    %v353 = vpop.trf.xlu0
    %v354 = vpop.trf.xlu0
    %v355 = vpop.trf.xlu0
    %v356 = vpop.trf.xlu0
    %v357 = vpop.trf.xlu0
    %v358 = vpop.trf.xlu0
    %v359 = vpop.trf.xlu0
    %v360 = vpop.trf.xlu0
    %v361 = vpop.trf.xlu0
    %v362 = vpop.trf.xlu0
    %v363 = vpop.trf.xlu0
    %v364 = vpop.trf.xlu0
    %v365 = vpop.trf.xlu0
    %v366 = vpop.trf.xlu0
    %v367 = vpop.trf.xlu0
    %v368 = vadd.f32 %v328, %v352
    %v369 = vadd.f32 %v329, %v353
    %v370 = vadd.f32 %v330, %v354
    %v371 = vadd.f32 %v331, %v355
    %v372 = vadd.f32 %v332, %v356
    %v373 = vadd.f32 %v333, %v357
    %v374 = vadd.f32 %v334, %v358
    %v375 = vadd.f32 %v335, %v359
    %v376 = vmul.f32 %v368, 0.5
    %v377 = vmul.f32 %v369, 0.5
    %v378 = vmul.f32 %v370, 0.5
    %v379 = vmul.f32 %v371, 0.5
    %v380 = vmul.f32 %v372, 0.5
    %v381 = vmul.f32 %v373, 0.5
    %v382 = vmul.f32 %v374, 0.5
    %v383 = vmul.f32 %v375, 0.5
    %v384 = vxor.u32 %v376, 2147483648
    %v385 = vxor.u32 %v377, 2147483648
    %v386 = vxor.u32 %v378, 2147483648
    %v387 = vxor.u32 %v379, 2147483648
    %v388 = vxor.u32 %v380, 2147483648
    %v389 = vxor.u32 %v381, 2147483648
    %v390 = vxor.u32 %v382, 2147483648
    %v391 = vxor.u32 %v383, 2147483648
    %v392 = vmul.f32 %v384, 1.442695
    %v393 = vpow.pop %v392
    %v394 = vmul.f32 %v385, 1.442695
    %v395 = vpow.pop %v394
    %v396 = vmul.f32 %v386, 1.442695
    %v397 = vpow.pop %v396
    %v398 = vmul.f32 %v387, 1.442695
    %v399 = vpow.pop %v398
    %v400 = vmul.f32 %v388, 1.442695
    %v401 = vpow.pop %v400
    %v402 = vmul.f32 %v389, 1.442695
    %v403 = vpow.pop %v402
    %v404 = vmul.f32 %v390, 1.442695
    %v405 = vpow.pop %v404
    %v406 = vmul.f32 %v391, 1.442695
    %v407 = vpow.pop %v406
    %v408 = vadd.f32 %v393, 1.0
    %v409 = vadd.f32 %v395, 1.0
    %v410 = vadd.f32 %v397, 1.0
    %v411 = vadd.f32 %v399, 1.0
    %v412 = vadd.f32 %v401, 1.0
    %v413 = vadd.f32 %v403, 1.0
    %v414 = vadd.f32 %v405, 1.0
    %v415 = vadd.f32 %v407, 1.0
    %v416 = vrcp.pop %v408
    %v417 = vmul.f32 1.0, %v416
    %v418 = vrcp.pop %v409
    %v419 = vmul.f32 1.0, %v418
    %v420 = vrcp.pop %v410
    %v421 = vmul.f32 1.0, %v420
    %v422 = vrcp.pop %v411
    %v423 = vmul.f32 1.0, %v422
    %v424 = vrcp.pop %v412
    %v425 = vmul.f32 1.0, %v424
    %v426 = vrcp.pop %v413
    %v427 = vmul.f32 1.0, %v426
    %v428 = vrcp.pop %v414
    %v429 = vmul.f32 1.0, %v428
    %v430 = vrcp.pop %v415
    %v431 = vmul.f32 1.0, %v430
    %v432 = vsub.f32 %v417, %v320
    %v433 = vsub.f32 %v419, %v321
    %v434 = vsub.f32 %v421, %v322
    %v435 = vsub.f32 %v423, %v323
    %v436 = vsub.f32 %v425, %v324
    %v437 = vsub.f32 %v427, %v325
    %v438 = vsub.f32 %v429, %v326
    %v439 = vsub.f32 %v431, %v327
    %v440 = vmax.f32 %v432, 0.0
    %v441 = vmax.f32 %v433, 0.0
    %v442 = vmax.f32 %v434, 0.0
    %v443 = vmax.f32 %v435, 0.0
    %v444 = vmax.f32 %v436, 0.0
    %v445 = vmax.f32 %v437, 0.0
    %v446 = vmax.f32 %v438, 0.0
    %v447 = vmax.f32 %v439, 0.0
    %v448 = vmul.f32 %v184, %v440
    %v449 = vmul.f32 %v185, %v441
    %v450 = vmul.f32 %v186, %v442
    %v451 = vmul.f32 %v187, %v443
    %v452 = vmul.f32 %v188, %v444
    %v453 = vmul.f32 %v189, %v445
    %v454 = vmul.f32 %v190, %v446
    %v455 = vmul.f32 %v191, %v447
    %v456 = vld [vmem:[%s5] sm:$0xff]
    %v457 = vld [vmem:[%s5 + $0x8] sm:$0xff]
    %v458 = vld [vmem:[%s5 + $0x10] sm:$0xff]
    %v459 = vld [vmem:[%s5 + $0x18] sm:$0xff]
    %v460 = vld [vmem:[%s5 + $0x20] sm:$0xff]
    %v461 = vld [vmem:[%s5 + $0x28] sm:$0xff]
    %v462 = vld [vmem:[%s5 + $0x30] sm:$0xff]
    %v463 = vld [vmem:[%s5 + $0x38] sm:$0xff]
    %v464 = vld [vmem:[%s6] sm:$0xff]
    %v465 = vld [vmem:[%s6 + $0x8] sm:$0xff]
    %v466 = vld [vmem:[%s6 + $0x10] sm:$0xff]
    %v467 = vld [vmem:[%s6 + $0x18] sm:$0xff]
    %vm468 = vcmask 261120
    %v470 = vsel %vm468, %v456, 0
    %v473 = vsel %vm468, %v457, 0
    %v476 = vsel %vm468, %v458, 0
    %v479 = vsel %vm468, %v459, 0
    %v482 = vsel %vm468, %v460, 0
    %v485 = vsel %vm468, %v461, 0
    %v488 = vsel %vm468, %v462, 0
    %v491 = vsel %vm468, %v463, 0
    %493 = vmatprep.subr.mxu0 0.0
    %494 = vmatpush1.msra.mxu0 0.0
    %495 = vmatprep.subr.mxu0 0.0
    %496 = vmatpush1.msra.mxu0 0.0
    %497 = vmatprep.subr.mxu0 0.0
    %498 = vmatpush1.msra.mxu0 0.0
    %499 = vmatprep.subr.mxu0 0.0
    %500 = vmatpush1.msra.mxu0 0.0
    %501 = vmatprep.subr.mxu0 0.0
    %502 = vmatpush1.msra.mxu0 0.0
    %503 = vmatprep.subr.mxu0 0.0
    %504 = vmatpush1.msra.mxu0 0.0
    %505 = vmatprep.subr.mxu0 0.0
    %506 = vmatpush1.msra.mxu0 0.0
    %507 = vmatprep.subr.mxu0 0.0
    %508 = vmatpush1.msra.mxu0 0.0
    %509 = vmatprep.subr.mxu0 0.0
    %510 = vmatpush1.msra.mxu0 0.0
    %511 = vmatprep.subr.mxu0 0.0
    %512 = vmatpush1.msra.mxu0 0.0
    %513 = vmatprep.subr.mxu0 0.0
    %514 = vmatpush1.msra.mxu0 0.0
    %515 = vmatprep.subr.mxu0 0.0
    %516 = vmatpush1.msra.mxu0 0.0
    %517 = vmatprep.subr.mxu0 0.0
    %518 = vmatpush1.msra.mxu0 %v467
    %519 = vmatprep.subr.mxu0 0.0
    %520 = vmatpush1.msra.mxu0 %v466
    %521 = vmatprep.subr.mxu0 0.0
    %522 = vmatpush1.msra.mxu0 %v465
    %523 = vmatprep.subr.mxu0 0.0
    %524 = vmatpush1.msra.mxu0 %v464
    %525 = vmatprep.subr.mxu0 0.0
    %526 = vmatpush2.msra.mxu0 0.0
    %527 = vmatprep.subr.mxu0 0.0
    %528 = vmatpush2.msra.mxu0 0.0
    %529 = vmatprep.subr.mxu0 0.0
    %530 = vmatpush2.msra.mxu0 0.0
    %531 = vmatprep.subr.mxu0 0.0
    %532 = vmatpush2.msra.mxu0 0.0
    %533 = vmatprep.subr.mxu0 0.0
    %534 = vmatpush2.msra.mxu0 0.0
    %535 = vmatprep.subr.mxu0 0.0
    %536 = vmatpush2.msra.mxu0 0.0
    %537 = vmatprep.subr.mxu0 0.0
    %538 = vmatpush2.msra.mxu0 0.0
    %539 = vmatprep.subr.mxu0 0.0
    %540 = vmatpush2.msra.mxu0 0.0
    %541 = vmatprep.subr.mxu0 0.0
    %542 = vmatpush2.msra.mxu0 0.0
    %543 = vmatprep.subr.mxu0 0.0
    %544 = vmatpush2.msra.mxu0 0.0
    %545 = vmatprep.subr.mxu0 0.0
    %546 = vmatpush2.msra.mxu0 0.0
    %547 = vmatprep.subr.mxu0 0.0
    %548 = vmatpush2.msra.mxu0 0.0
    %549 = vmatprep.subr.mxu0 0.0
    %550 = vmatpush2.msra.mxu0 0.0
    %551 = vmatprep.subr.mxu0 0.0
    %552 = vmatpush2.msra.mxu0 0.0
    %553 = vmatprep.subr.mxu0 0.0
    %554 = vmatpush2.msra.mxu0 0.0
    %555 = vmatprep.subr.mxu0 0.0
    %556 = vmatpush2.msra.mxu0 0.0
    %557 = vmatprep.mubr.f32.mxu0 0.0
    %558 = vmatmul.mubr.f32.gmra.mxu0 %v470
    %v559 = vpop.f32.mrf.mxu0
    %v560 = vadd.f32 0.0, %v559
    %v561 = vpop.f32.mrf.mxu0
    %562 = vmatprep.mubr.f32.mxu0 0.0
    %563 = vmatmul.mubr.f32.gmra.mxu0 %v473
    %v564 = vpop.f32.mrf.mxu0
    %v565 = vadd.f32 0.0, %v564
    %v566 = vpop.f32.mrf.mxu0
    %567 = vmatprep.mubr.f32.mxu0 0.0
    %568 = vmatmul.mubr.f32.gmra.mxu0 %v476
    %v569 = vpop.f32.mrf.mxu0
    %v570 = vadd.f32 0.0, %v569
    %v571 = vpop.f32.mrf.mxu0
    %572 = vmatprep.mubr.f32.mxu0 0.0
    %573 = vmatmul.mubr.f32.gmra.mxu0 %v479
    %v574 = vpop.f32.mrf.mxu0
    %v575 = vadd.f32 0.0, %v574
    %v576 = vpop.f32.mrf.mxu0
    %577 = vmatprep.mubr.f32.mxu0 0.0
    %578 = vmatmul.mubr.f32.gmra.mxu0 %v482
    %v579 = vpop.f32.mrf.mxu0
    %v580 = vadd.f32 0.0, %v579
    %v581 = vpop.f32.mrf.mxu0
    %582 = vmatprep.mubr.f32.mxu0 0.0
    %583 = vmatmul.mubr.f32.gmra.mxu0 %v485
    %v584 = vpop.f32.mrf.mxu0
    %v585 = vadd.f32 0.0, %v584
    %v586 = vpop.f32.mrf.mxu0
    %587 = vmatprep.mubr.f32.mxu0 0.0
    %588 = vmatmul.mubr.f32.gmra.mxu0 %v488
    %v589 = vpop.f32.mrf.mxu0
    %v590 = vadd.f32 0.0, %v589
    %v591 = vpop.f32.mrf.mxu0
    %592 = vmatprep.mubr.f32.mxu0 0.0
    %593 = vmatmul.mubr.f32.gmra.mxu0 %v491
    %v594 = vpop.f32.mrf.mxu0
    %v595 = vadd.f32 0.0, %v594
    %v596 = vpop.f32.mrf.mxu0
    %597 = vdwg.mxu0
    %v598 = vld [vmem:[%s7] sm:$0x1]
    %v600 = vlaneseq
    %v601 = vshrl.u32 %v600, 7
    %v602 = vsub.s32 0, %v601
    %v603 = vrot.slane %v598, %v602
    %vm605 = vcmask 523264
    %v607 = vsel %vm605, %v448, 0
    %v610 = vsel %vm605, %v449, 0
    %v613 = vsel %vm605, %v450, 0
    %v616 = vsel %vm605, %v451, 0
    %v619 = vsel %vm605, %v452, 0
    %v622 = vsel %vm605, %v453, 0
    %v625 = vsel %vm605, %v454, 0
    %v628 = vsel %vm605, %v455, 0
    %630 = vmatprep.subr.mxu0 0.0
    %631 = vmatpush1.msra.mxu0 0.0
    %632 = vmatprep.subr.mxu0 0.0
    %633 = vmatpush1.msra.mxu0 0.0
    %634 = vmatprep.subr.mxu0 0.0
    %635 = vmatpush1.msra.mxu0 0.0
    %636 = vmatprep.subr.mxu0 0.0
    %637 = vmatpush1.msra.mxu0 0.0
    %638 = vmatprep.subr.mxu0 0.0
    %639 = vmatpush1.msra.mxu0 0.0
    %640 = vmatprep.subr.mxu0 0.0
    %641 = vmatpush1.msra.mxu0 0.0
    %642 = vmatprep.subr.mxu0 0.0
    %643 = vmatpush1.msra.mxu0 0.0
    %644 = vmatprep.subr.mxu0 0.0
    %645 = vmatpush1.msra.mxu0 0.0
    %646 = vmatprep.subr.mxu0 0.0
    %647 = vmatpush1.msra.mxu0 %v595
    %648 = vmatprep.subr.mxu0 0.0
    %649 = vmatpush1.msra.mxu0 %v590
    %650 = vmatprep.subr.mxu0 0.0
    %651 = vmatpush1.msra.mxu0 %v585
    %652 = vmatprep.subr.mxu0 0.0
    %653 = vmatpush1.msra.mxu0 %v580
    %654 = vmatprep.subr.mxu0 0.0
    %655 = vmatpush1.msra.mxu0 %v575
    %656 = vmatprep.subr.mxu0 0.0
    %657 = vmatpush1.msra.mxu0 %v570
    %658 = vmatprep.subr.mxu0 0.0
    %659 = vmatpush1.msra.mxu0 %v565
    %660 = vmatprep.subr.mxu0 0.0
    %661 = vmatpush1.msra.mxu0 %v560
    %662 = vmatprep.subr.mxu0 0.0
    %663 = vmatpush2.msra.mxu0 0.0
    %664 = vmatprep.subr.mxu0 0.0
    %665 = vmatpush2.msra.mxu0 0.0
    %666 = vmatprep.subr.mxu0 0.0
    %667 = vmatpush2.msra.mxu0 0.0
    %668 = vmatprep.subr.mxu0 0.0
    %669 = vmatpush2.msra.mxu0 0.0
    %670 = vmatprep.subr.mxu0 0.0
    %671 = vmatpush2.msra.mxu0 0.0
    %672 = vmatprep.subr.mxu0 0.0
    %673 = vmatpush2.msra.mxu0 0.0
    %674 = vmatprep.subr.mxu0 0.0
    %675 = vmatpush2.msra.mxu0 0.0
    %676 = vmatprep.subr.mxu0 0.0
    %677 = vmatpush2.msra.mxu0 0.0
    %678 = vmatprep.subr.mxu0 0.0
    %679 = vmatpush2.msra.mxu0 0.0
    %680 = vmatprep.subr.mxu0 0.0
    %681 = vmatpush2.msra.mxu0 0.0
    %682 = vmatprep.subr.mxu0 0.0
    %683 = vmatpush2.msra.mxu0 0.0
    %684 = vmatprep.subr.mxu0 0.0
    %685 = vmatpush2.msra.mxu0 0.0
    %686 = vmatprep.subr.mxu0 0.0
    %687 = vmatpush2.msra.mxu0 0.0
    %688 = vmatprep.subr.mxu0 0.0
    %689 = vmatpush2.msra.mxu0 0.0
    %690 = vmatprep.subr.mxu0 0.0
    %691 = vmatpush2.msra.mxu0 0.0
    %692 = vmatprep.subr.mxu0 0.0
    %693 = vmatpush2.msra.mxu0 0.0
    %694 = vmatprep.mubr.f32.mxu0 0.0
    %695 = vmatmul.mubr.f32.gmra.mxu0 %v607
    %v696 = vpop.f32.mrf.mxu0
    %v697 = vadd.f32 %v603, %v696
    %v698 = vpop.f32.mrf.mxu0
    %699 = vmatprep.mubr.f32.mxu0 0.0
    %700 = vmatmul.mubr.f32.gmra.mxu0 %v610
    %v701 = vpop.f32.mrf.mxu0
    %v702 = vadd.f32 %v603, %v701
    %v703 = vpop.f32.mrf.mxu0
    %704 = vmatprep.mubr.f32.mxu0 0.0
    %705 = vmatmul.mubr.f32.gmra.mxu0 %v613
    %v706 = vpop.f32.mrf.mxu0
    %v707 = vadd.f32 %v603, %v706
    %v708 = vpop.f32.mrf.mxu0
    %709 = vmatprep.mubr.f32.mxu0 0.0
    %710 = vmatmul.mubr.f32.gmra.mxu0 %v616
    %v711 = vpop.f32.mrf.mxu0
    %v712 = vadd.f32 %v603, %v711
    %v713 = vpop.f32.mrf.mxu0
    %714 = vmatprep.mubr.f32.mxu0 0.0
    %715 = vmatmul.mubr.f32.gmra.mxu0 %v619
    %v716 = vpop.f32.mrf.mxu0
    %v717 = vadd.f32 %v603, %v716
    %v718 = vpop.f32.mrf.mxu0
    %719 = vmatprep.mubr.f32.mxu0 0.0
    %720 = vmatmul.mubr.f32.gmra.mxu0 %v622
    %v721 = vpop.f32.mrf.mxu0
    %v722 = vadd.f32 %v603, %v721
    %v723 = vpop.f32.mrf.mxu0
    %724 = vmatprep.mubr.f32.mxu0 0.0
    %725 = vmatmul.mubr.f32.gmra.mxu0 %v625
    %v726 = vpop.f32.mrf.mxu0
    %v727 = vadd.f32 %v603, %v726
    %v728 = vpop.f32.mrf.mxu0
    %729 = vmatprep.mubr.f32.mxu0 0.0
    %730 = vmatmul.mubr.f32.gmra.mxu0 %v628
    %v731 = vpop.f32.mrf.mxu0
    %v732 = vadd.f32 %v603, %v731
    %v733 = vpop.f32.mrf.mxu0
    %734 = vdwg.mxu0
    %v735 = vmax.f32 %v697, 0.0
    %v736 = vmax.f32 %v702, 0.0
    %v737 = vmax.f32 %v707, 0.0
    %v738 = vmax.f32 %v712, 0.0
    %v739 = vmax.f32 %v717, 0.0
    %v740 = vmax.f32 %v722, 0.0
    %v741 = vmax.f32 %v727, 0.0
    %v742 = vmax.f32 %v732, 0.0
    %v743 = vld [vmem:[#allocation7] sm:$0xff]
    %v744 = vld [vmem:[#allocation7 + $0x8] sm:$0xff]
    %v745 = vld [vmem:[#allocation7 + $0x10] sm:$0xff]
    %v746 = vld [vmem:[#allocation7 + $0x18] sm:$0xff]
    %v747 = vld [vmem:[#allocation7 + $0x20] sm:$0xff]
    %v748 = vld [vmem:[#allocation7 + $0x28] sm:$0xff]
    %v749 = vld [vmem:[#allocation7 + $0x30] sm:$0xff]
    %v750 = vld [vmem:[#allocation7 + $0x38] sm:$0xff]
    %v751 = vmul.f32 %v735, %v743
    %v752 = vmul.f32 %v736, %v744
    %v753 = vmul.f32 %v737, %v745
    %v754 = vmul.f32 %v738, %v746
    %v755 = vmul.f32 %v739, %v747
    %v756 = vmul.f32 %v740, %v748
    %v757 = vmul.f32 %v741, %v749
    %v758 = vmul.f32 %v742, %v750
    %v759 = vld [vmem:[%s8] sm:$0xff]
    %v760 = vld [vmem:[%s8 + $0x8] sm:$0xff]
    %v761 = vld [vmem:[%s8 + $0x10] sm:$0xff]
    %v762 = vld [vmem:[%s8 + $0x18] sm:$0xff]
    %v763 = vld [vmem:[%s8 + $0x20] sm:$0xff]
    %v764 = vld [vmem:[%s8 + $0x28] sm:$0xff]
    %v765 = vld [vmem:[%s8 + $0x30] sm:$0xff]
    %v766 = vld [vmem:[%s8 + $0x38] sm:$0xff]
    %v767 = vld [vmem:[%s8 + $0x40] sm:$0xff]
    %v768 = vld [vmem:[%s8 + $0x48] sm:$0xff]
    %v769 = vld [vmem:[%s8 + $0x50] sm:$0xff]
    %v770 = vld [vmem:[%s8 + $0x58] sm:$0xff]
    %v771 = vld [vmem:[%s8 + $0x60] sm:$0xff]
    %v772 = vld [vmem:[%s8 + $0x68] sm:$0xff]
    %v773 = vld [vmem:[%s8 + $0x70] sm:$0xff]
    %v774 = vld [vmem:[%s8 + $0x78] sm:$0xff]
    %775 = vmatprep.subr.mxu0 0.0
    %776 = vmatpush1.msra.mxu0 %v774
    %777 = vmatprep.subr.mxu0 0.0
    %778 = vmatpush1.msra.mxu0 %v773
    %779 = vmatprep.subr.mxu0 0.0
    %780 = vmatpush1.msra.mxu0 %v772
    %781 = vmatprep.subr.mxu0 0.0
    %782 = vmatpush1.msra.mxu0 %v771
    %783 = vmatprep.subr.mxu0 0.0
    %784 = vmatpush1.msra.mxu0 %v770
    %785 = vmatprep.subr.mxu0 0.0
    %786 = vmatpush1.msra.mxu0 %v769
    %787 = vmatprep.subr.mxu0 0.0
    %788 = vmatpush1.msra.mxu0 %v768
    %789 = vmatprep.subr.mxu0 0.0
    %790 = vmatpush1.msra.mxu0 %v767
    %791 = vmatprep.subr.mxu0 0.0
    %792 = vmatpush1.msra.mxu0 %v766
    %793 = vmatprep.subr.mxu0 0.0
    %794 = vmatpush1.msra.mxu0 %v765
    %795 = vmatprep.subr.mxu0 0.0
    %796 = vmatpush1.msra.mxu0 %v764
    %797 = vmatprep.subr.mxu0 0.0
    %798 = vmatpush1.msra.mxu0 %v763
    %799 = vmatprep.subr.mxu0 0.0
    %800 = vmatpush1.msra.mxu0 %v762
    %801 = vmatprep.subr.mxu0 0.0
    %802 = vmatpush1.msra.mxu0 %v761
    %803 = vmatprep.subr.mxu0 0.0
    %804 = vmatpush1.msra.mxu0 %v760
    %805 = vmatprep.subr.mxu0 0.0
    %806 = vmatpush1.msra.mxu0 %v759
    %807 = vmatprep.subr.mxu0 0.0
    %808 = vmatpush2.msra.mxu0 0.0
    %809 = vmatprep.subr.mxu0 0.0
    %810 = vmatpush2.msra.mxu0 0.0
    %811 = vmatprep.subr.mxu0 0.0
    %812 = vmatpush2.msra.mxu0 0.0
    %813 = vmatprep.subr.mxu0 0.0
    %814 = vmatpush2.msra.mxu0 0.0
    %815 = vmatprep.subr.mxu0 0.0
    %816 = vmatpush2.msra.mxu0 0.0
    %817 = vmatprep.subr.mxu0 0.0
    %818 = vmatpush2.msra.mxu0 0.0
    %819 = vmatprep.subr.mxu0 0.0
    %820 = vmatpush2.msra.mxu0 0.0
    %821 = vmatprep.subr.mxu0 0.0
    %822 = vmatpush2.msra.mxu0 0.0
    %823 = vmatprep.subr.mxu0 0.0
    %824 = vmatpush2.msra.mxu0 0.0
    %825 = vmatprep.subr.mxu0 0.0
    %826 = vmatpush2.msra.mxu0 0.0
    %827 = vmatprep.subr.mxu0 0.0
    %828 = vmatpush2.msra.mxu0 0.0
    %829 = vmatprep.subr.mxu0 0.0
    %830 = vmatpush2.msra.mxu0 0.0
    %831 = vmatprep.subr.mxu0 0.0
    %832 = vmatpush2.msra.mxu0 0.0
    %833 = vmatprep.subr.mxu0 0.0
    %834 = vmatpush2.msra.mxu0 0.0
    %835 = vmatprep.subr.mxu0 0.0
    %836 = vmatpush2.msra.mxu0 0.0
    %837 = vmatprep.subr.mxu0 0.0
    %838 = vmatpush2.msra.mxu0 0.0
    %839 = vmatprep.mubr.f32.mxu0 0.0
    %840 = vmatmul.mubr.f32.gmra.mxu0 %v751
    %v841 = vpop.f32.mrf.mxu0
    %v842 = vadd.f32 0.0, %v841
    %v843 = vpop.f32.mrf.mxu0
    %844 = vmatprep.mubr.f32.mxu0 0.0
    %845 = vmatmul.mubr.f32.gmra.mxu0 %v752
    %v846 = vpop.f32.mrf.mxu0
    %v847 = vadd.f32 0.0, %v846
    %v848 = vpop.f32.mrf.mxu0
    %849 = vmatprep.mubr.f32.mxu0 0.0
    %850 = vmatmul.mubr.f32.gmra.mxu0 %v753
    %v851 = vpop.f32.mrf.mxu0
    %v852 = vadd.f32 0.0, %v851
    %v853 = vpop.f32.mrf.mxu0
    %854 = vmatprep.mubr.f32.mxu0 0.0
    %855 = vmatmul.mubr.f32.gmra.mxu0 %v754
    %v856 = vpop.f32.mrf.mxu0
    %v857 = vadd.f32 0.0, %v856
    %v858 = vpop.f32.mrf.mxu0
    %859 = vmatprep.mubr.f32.mxu0 0.0
    %860 = vmatmul.mubr.f32.gmra.mxu0 %v755
    %v861 = vpop.f32.mrf.mxu0
    %v862 = vadd.f32 0.0, %v861
    %v863 = vpop.f32.mrf.mxu0
    %864 = vmatprep.mubr.f32.mxu0 0.0
    %865 = vmatmul.mubr.f32.gmra.mxu0 %v756
    %v866 = vpop.f32.mrf.mxu0
    %v867 = vadd.f32 0.0, %v866
    %v868 = vpop.f32.mrf.mxu0
    %869 = vmatprep.mubr.f32.mxu0 0.0
    %870 = vmatmul.mubr.f32.gmra.mxu0 %v757
    %v871 = vpop.f32.mrf.mxu0
    %v872 = vadd.f32 0.0, %v871
    %v873 = vpop.f32.mrf.mxu0
    %874 = vmatprep.mubr.f32.mxu0 0.0
    %875 = vmatmul.mubr.f32.gmra.mxu0 %v758
    %v876 = vpop.f32.mrf.mxu0
    %v877 = vadd.f32 0.0, %v876
    %v878 = vpop.f32.mrf.mxu0
    %879 = vdwg.mxu0
    %v880 = vld [vmem:[%s9] sm:$0x1]
    %v882 = vlaneseq
    %v883 = vshrl.u32 %v882, 7
    %v884 = vsub.s32 0, %v883
    %v885 = vrot.slane %v880, %v884
    %887 = vmatprep.subr.mxu0 0.0
    %888 = vmatpush1.msra.mxu0 0.0
    %889 = vmatprep.subr.mxu0 0.0
    %890 = vmatpush1.msra.mxu0 0.0
    %891 = vmatprep.subr.mxu0 0.0
    %892 = vmatpush1.msra.mxu0 0.0
    %893 = vmatprep.subr.mxu0 0.0
    %894 = vmatpush1.msra.mxu0 0.0
    %895 = vmatprep.subr.mxu0 0.0
    %896 = vmatpush1.msra.mxu0 0.0
    %897 = vmatprep.subr.mxu0 0.0
    %898 = vmatpush1.msra.mxu0 0.0
    %899 = vmatprep.subr.mxu0 0.0
    %900 = vmatpush1.msra.mxu0 0.0
    %901 = vmatprep.subr.mxu0 0.0
    %902 = vmatpush1.msra.mxu0 0.0
    %903 = vmatprep.subr.mxu0 0.0
    %904 = vmatpush1.msra.mxu0 %v877
    %905 = vmatprep.subr.mxu0 0.0
    %906 = vmatpush1.msra.mxu0 %v872
    %907 = vmatprep.subr.mxu0 0.0
    %908 = vmatpush1.msra.mxu0 %v867
    %909 = vmatprep.subr.mxu0 0.0
    %910 = vmatpush1.msra.mxu0 %v862
    %911 = vmatprep.subr.mxu0 0.0
    %912 = vmatpush1.msra.mxu0 %v857
    %913 = vmatprep.subr.mxu0 0.0
    %914 = vmatpush1.msra.mxu0 %v852
    %915 = vmatprep.subr.mxu0 0.0
    %916 = vmatpush1.msra.mxu0 %v847
    %917 = vmatprep.subr.mxu0 0.0
    %918 = vmatpush1.msra.mxu0 %v842
    %919 = vmatprep.subr.mxu0 0.0
    %920 = vmatpush2.msra.mxu0 0.0
    %921 = vmatprep.subr.mxu0 0.0
    %922 = vmatpush2.msra.mxu0 0.0
    %923 = vmatprep.subr.mxu0 0.0
    %924 = vmatpush2.msra.mxu0 0.0
    %925 = vmatprep.subr.mxu0 0.0
    %926 = vmatpush2.msra.mxu0 0.0
    %927 = vmatprep.subr.mxu0 0.0
    %928 = vmatpush2.msra.mxu0 0.0
    %929 = vmatprep.subr.mxu0 0.0
    %930 = vmatpush2.msra.mxu0 0.0
    %931 = vmatprep.subr.mxu0 0.0
    %932 = vmatpush2.msra.mxu0 0.0
    %933 = vmatprep.subr.mxu0 0.0
    %934 = vmatpush2.msra.mxu0 0.0
    %935 = vmatprep.subr.mxu0 0.0
    %936 = vmatpush2.msra.mxu0 0.0
    %937 = vmatprep.subr.mxu0 0.0
    %938 = vmatpush2.msra.mxu0 0.0
    %939 = vmatprep.subr.mxu0 0.0
    %940 = vmatpush2.msra.mxu0 0.0
    %941 = vmatprep.subr.mxu0 0.0
    %942 = vmatpush2.msra.mxu0 0.0
    %943 = vmatprep.subr.mxu0 0.0
    %944 = vmatpush2.msra.mxu0 0.0
    %945 = vmatprep.subr.mxu0 0.0
    %946 = vmatpush2.msra.mxu0 0.0
    %947 = vmatprep.subr.mxu0 0.0
    %948 = vmatpush2.msra.mxu0 0.0
    %949 = vmatprep.subr.mxu0 0.0
    %950 = vmatpush2.msra.mxu0 0.0
    %951 = vmatprep.mubr.f32.mxu0 0.0
    %952 = vmatmul.mubr.f32.gmra.mxu0 %v607
    %v953 = vpop.f32.mrf.mxu0
    %v954 = vadd.f32 %v885, %v953
    %v955 = vpop.f32.mrf.mxu0
    %956 = vmatprep.mubr.f32.mxu0 0.0
    %957 = vmatmul.mubr.f32.gmra.mxu0 %v610
    %v958 = vpop.f32.mrf.mxu0
    %v959 = vadd.f32 %v885, %v958
    %v960 = vpop.f32.mrf.mxu0
    %961 = vmatprep.mubr.f32.mxu0 0.0
    %962 = vmatmul.mubr.f32.gmra.mxu0 %v613
    %v963 = vpop.f32.mrf.mxu0
    %v964 = vadd.f32 %v885, %v963
    %v965 = vpop.f32.mrf.mxu0
    %966 = vmatprep.mubr.f32.mxu0 0.0
    %967 = vmatmul.mubr.f32.gmra.mxu0 %v616
    %v968 = vpop.f32.mrf.mxu0
    %v969 = vadd.f32 %v885, %v968
    %v970 = vpop.f32.mrf.mxu0
    %971 = vmatprep.mubr.f32.mxu0 0.0
    %972 = vmatmul.mubr.f32.gmra.mxu0 %v619
    %v973 = vpop.f32.mrf.mxu0
    %v974 = vadd.f32 %v885, %v973
    %v975 = vpop.f32.mrf.mxu0
    %976 = vmatprep.mubr.f32.mxu0 0.0
    %977 = vmatmul.mubr.f32.gmra.mxu0 %v622
    %v978 = vpop.f32.mrf.mxu0
    %v979 = vadd.f32 %v885, %v978
    %v980 = vpop.f32.mrf.mxu0
    %981 = vmatprep.mubr.f32.mxu0 0.0
    %982 = vmatmul.mubr.f32.gmra.mxu0 %v625
    %v983 = vpop.f32.mrf.mxu0
    %v984 = vadd.f32 %v885, %v983
    %v985 = vpop.f32.mrf.mxu0
    %986 = vmatprep.mubr.f32.mxu0 0.0
    %987 = vmatmul.mubr.f32.gmra.mxu0 %v628
    %v988 = vpop.f32.mrf.mxu0
    %v989 = vadd.f32 %v885, %v988
    %v990 = vpop.f32.mrf.mxu0
    %991 = vdwg.mxu0
    %992 = vst [vmem:[#allocation8] sm:$0xff] %v954
    %993 = vst [vmem:[#allocation8 + $0x8] sm:$0xff] %v959
    %994 = vst [vmem:[#allocation8 + $0x10] sm:$0xff] %v964
    %995 = vst [vmem:[#allocation8 + $0x18] sm:$0xff] %v969
    %996 = vst [vmem:[#allocation8 + $0x20] sm:$0xff] %v974
    %997 = vst [vmem:[#allocation8 + $0x28] sm:$0xff] %v979
    %998 = vst [vmem:[#allocation8 + $0x30] sm:$0xff] %v984
    %999 = vst [vmem:[#allocation8 + $0x38] sm:$0xff] %v989
    // Predicated region
    $region58: #{tpu_custom_call.1} parent=1 // pred_check
      _
    $region59: #{tpu_custom_call.1} parent=1 // pred_check_branch
      %1001 = sbr.rel (0) target = $region61
    $region60: #{tpu_custom_call.1} parent=1 // pred_region
      %s1003 = ssub.s32 1024, 1024
      %1004 = vsyncadd [#allocation4], %s1003
      %s1005 = sshll.u32 [#allocation8], 4
      %s1006 = int_to_ptr.vmem [resolvable:$true] %s1005
      %1011 = dma.vmem_to_hbm [thread:$0]  %s1006, 1024, %s11, [#allocation4], 128, 128, 8
    $region61: #{tpu_custom_call.1} parent=1 // pred_fallthru
      _
    // Predicated region
    $region62: #{tpu_custom_call.1} parent=1 // pred_check
      _
    $region63: #{tpu_custom_call.1} parent=1 // pred_check_branch
      %1013 = sbr.rel (0) target = $region65
    $region64: #{tpu_custom_call.1} parent=1 // pred_region
      %1014 = dma.done [#allocation4], 1024
    $region65: #{tpu_custom_call.1} parent=1 // pred_fallthru
      _
    %1015 = vsyncpa [#allocation3], 1
    %1016 = vsyncpa [#allocation6], 1
    %1017 = vsyncpa [#allocation4], 1

</llo_original>
